<compile_context>
chip_gen: v7x
topology: tpu7x:2x2x1
jax: 0.10.0
libtpu: 0.0.40
codegen_flags: <defaults>
</compile_context>

<pallas_src>
import jax
import jax.numpy as jnp
from jax.experimental import pallas as pl
from jax.experimental.pallas import tpu as pltpu

IN_FEATURES = 28 * 28      # 784
HIDDEN = 64                # logical hidden size
HIDDEN_PAD = 128           # lane-padded hidden size
OUT_FEATURES = 10


def _round_up(n, m):
    return ((n + m - 1) // m) * m


def _cdiv(a, b):
    return -(-a // b)


def _select_tile_and_vmem():
    """Per-generation batch-tile cap and scoped-VMEM limit.

    Fails safe: unknown / newer chips get the v7x-safe setting (v7x has only
    64 MiB physical VMEM per TensorCore); v5e/v6e (128 MiB physical) go bigger
    to amortize the ~0.35 us per-grid-step overhead.
    """
    try:
        kind = jax.devices()[0].device_kind.lower()
    except Exception:
        kind = ""
    if ("v5" in kind) or ("v6" in kind):
        return 4096, 96 * 1024 * 1024
    return 2048, 48 * 1024 * 1024


def netfull_kernel(x_ref, w1_ref, b1_ref, w2_ref, b2_ref, o_ref):
    # x arrives f32 (no wrapper-side bf16 copy -> no extra HBM round trip);
    # cast to bf16 here, right before the MXU.
    x_bf16 = x_ref[...].astype(jnp.bfloat16)

    # --- Layer 1: Linear(784 -> 128 padded) + tanh ------------------------
    h1 = jnp.dot(x_bf16, w1_ref[...], preferred_element_type=jnp.float32)
    h1 = jnp.tanh(h1 + b1_ref[...])                       # (TB, 128) f32
    # Padded columns: w1 cols and b1 entries are 0 -> tanh(0)=0, which then
    # multiplies zero rows of w2 below, so padding is a no-op.

    # --- Layer 2: Linear(128 padded -> 10) + tanh --------------------------
    h2 = jnp.dot(h1.astype(jnp.bfloat16), w2_ref[...],
                 preferred_element_type=jnp.float32)
    h2 = jnp.tanh(h2 + b2_ref[...])                       # (TB, 10) f32

    # --- log_softmax over dim=1 (numerically stable, all f32) --------------
    m = jnp.max(h2, axis=-1, keepdims=True)
    s = h2 - m
    lse = jnp.log(jnp.sum(jnp.exp(s), axis=-1, keepdims=True))
    o_ref[...] = (s - lse).astype(o_ref.dtype)


def prepare_params(w1, b1, w2, b2):
    """One-time param prep: hidden-dim padding to 128 lanes + bf16 weight cast.

    w1: (784, 64), b1: (64,), w2: (64, 10), b2: (10,)  (x @ W + b layout).
    """
    w1p = jnp.zeros((IN_FEATURES, HIDDEN_PAD), jnp.float32)
    w1p = w1p.at[:, :HIDDEN].set(w1.astype(jnp.float32)).astype(jnp.bfloat16)
    b1p = jnp.zeros((1, HIDDEN_PAD), jnp.float32).at[0, :HIDDEN].set(
        b1.astype(jnp.float32))
    w2p = jnp.zeros((HIDDEN_PAD, OUT_FEATURES), jnp.float32)
    w2p = w2p.at[:HIDDEN, :].set(w2.astype(jnp.float32)).astype(jnp.bfloat16)
    b2p = b2.reshape(1, OUT_FEATURES).astype(jnp.float32)
    return w1p, b1p, w2p, b2p


def netfull_forward(x_nchw, params):
    """x_nchw: (B, 1, 28, 28). Returns (B, 10) f32 log-probs."""
    w1p, b1p, w2p, b2p = params
    B = x_nchw.shape[0]

    # Flatten like torch's x.view(B, -1). Kept f32: the kernel does the bf16
    # cast internally so x makes exactly one HBM pass.
    x = x_nchw.reshape(B, IN_FEATURES)
    if x.dtype != jnp.float32:
        x = x.astype(jnp.float32)

    tb_max, vmem_limit = _select_tile_and_vmem()

    # Balanced tiling: bound padding waste to <16 rows per tile.
    b16 = _round_up(B, 16)
    num_tiles = _cdiv(b16, tb_max)
    if num_tiles == 1 and b16 >= 256:
        num_tiles = 2              # keep both v7x TensorCores busy
    tb = _round_up(_cdiv(b16, num_tiles), 16)
    b_pad = num_tiles * tb
    if b_pad != B:
        x = jnp.pad(x, ((0, b_pad - B), (0, 0)))

    out = pl.pallas_call(
        netfull_kernel,
        out_shape=jax.ShapeDtypeStruct((b_pad, OUT_FEATURES), jnp.float32),
        grid=(num_tiles,),
        in_specs=[
            pl.BlockSpec((tb, IN_FEATURES), lambda i: (i, 0)),           # x (streamed)
            pl.BlockSpec((IN_FEATURES, HIDDEN_PAD), lambda i: (0, 0)),   # w1 (resident)
            pl.BlockSpec((1, HIDDEN_PAD), lambda i: (0, 0)),             # b1
            pl.BlockSpec((HIDDEN_PAD, OUT_FEATURES), lambda i: (0, 0)),  # w2
            pl.BlockSpec((1, OUT_FEATURES), lambda i: (0, 0)),           # b2
        ],
        out_specs=pl.BlockSpec((tb, OUT_FEATURES), lambda i: (i, 0)),
        compiler_params=pltpu.CompilerParams(
            dimension_semantics=("parallel",),
            vmem_limit_bytes=vmem_limit),
    )(x, w1p, b1p, w2p, b2p)

    return out[:B]


def init_params(key):
    """Deterministic init mimicking PyTorch Linear default (U[-1/sqrt(fan_in), +])."""
    k1, k2, k3, k4 = jax.random.split(key, 4)
    bound1 = 1.0 / jnp.sqrt(IN_FEATURES)
    bound2 = 1.0 / jnp.sqrt(HIDDEN)
    # Stored as (in, out) so the kernel computes x @ W + b.
    w1 = jax.random.uniform(k1, (IN_FEATURES, HIDDEN), jnp.float32, -bound1, bound1)
    b1 = jax.random.uniform(k2, (HIDDEN,), jnp.float32, -bound1, bound1)
    w2 = jax.random.uniform(k3, (HIDDEN, OUT_FEATURES), jnp.float32, -bound2, bound2)
    b2 = jax.random.uniform(k4, (OUT_FEATURES,), jnp.float32, -bound2, bound2)
    return w1, b1, w2, b2


def _ref_mixed(xf, w1, b1, w2, b2):
    """Same mixed precision as the kernel (bf16 operands, f32 accum/elementwise)."""
    xb = xf.astype(jnp.bfloat16)
    w1b = w1.astype(jnp.bfloat16)
    w2b = w2.astype(jnp.bfloat16)
    h1 = jnp.tanh(jnp.dot(xb, w1b, preferred_element_type=jnp.float32) + b1)
    h2 = jnp.tanh(jnp.dot(h1.astype(jnp.bfloat16), w2b,
                          preferred_element_type=jnp.float32) + b2)
    return jax.nn.log_softmax(h2, axis=1)


if __name__ == "__main__":
    key = jax.random.PRNGKey(0)
    kx, kx2, kp = jax.random.split(key, 3)

    w1, b1, w2, b2 = init_params(kp)
    params = prepare_params(w1, b1, w2, b2)                   # one-time prep

    # --- Small batch (exercises the padded single-tile path) --------------
    B = 8
    x = jax.random.normal(kx, (B, 1, 28, 28), jnp.float32)    # NCHW, like PyTorch
    out = jax.block_until_ready(netfull_forward(x, params))
    assert out.shape == (B, 10)

    xf = x.reshape(B, -1)
    ref_mixed = _ref_mixed(xf, w1, b1, w2, b2)
    assert jnp.allclose(out, ref_mixed, atol=2e-4), "mismatch vs mixed-precision ref"

    # Full-f32 PyTorch-equivalent forward -> loose tolerance (only difference
    # is bf16 rounding of x / weights inside the kernel).
    h1f = jnp.tanh(xf @ w1 + b1)
    h2f = jnp.tanh(h1f @ w2 + b2)
    ref_f32 = jax.nn.log_softmax(h2f, axis=1)
    assert jnp.allclose(out, ref_f32, atol=0.1), "mismatch vs f32 ref"

    # --- Larger batch (exercises balanced multi-tile + parallel grid) ------
    B2 = 300
    x2 = jax.random.normal(kx2, (B2, 1, 28, 28), jnp.float32)
    out2 = jax.block_until_ready(netfull_forward(x2, params))
    assert out2.shape == (B2, 10)
    ref2 = _ref_mixed(x2.reshape(B2, -1), w1, b1, w2, b2)
    assert jnp.allclose(out2, ref2, atol=2e-4), "mismatch vs mixed ref (B=300)"

    print("KERNEL_OK")
</pallas_src>

<mosaic_0001>
module attributes {stable_mosaic.version = 11 : i64} {
  func.func @netfull_kernel(%arg0: i32, %arg1: memref<16x784xf32, #tpu.memory_space<vmem>>, %arg2: memref<784x128xbf16, #tpu.memory_space<vmem>>, %arg3: memref<1x128xf32, #tpu.memory_space<vmem>>, %arg4: memref<128x10xbf16, #tpu.memory_space<vmem>>, %arg5: memref<1x10xf32, #tpu.memory_space<vmem>>, %arg6: memref<16x10xf32, #tpu.memory_space<vmem>>) attributes {dimension_semantics = [#tpu.dimension_semantics<parallel>], iteration_bounds = array<i64: 1>, scalar_prefetch = 0 : i64, scratch_operands = 0 : i64, tpu.core_type = #tpu.core_type<tc>, window_params = [{transform_indices = @transform_0, window_bounds = array<i64: 16, 784>}, {pipeline_mode = #tpu.pipeline_mode<synchronous>, transform_indices = @transform_1, window_bounds = array<i64: 784, 128>}, {pipeline_mode = #tpu.pipeline_mode<synchronous>, transform_indices = @transform_2, window_bounds = array<i64: 1, 128>}, {pipeline_mode = #tpu.pipeline_mode<synchronous>, transform_indices = @transform_3, window_bounds = array<i64: 128, 10>}, {pipeline_mode = #tpu.pipeline_mode<synchronous>, transform_indices = @transform_4, window_bounds = array<i64: 1, 10>}, {transform_indices = @transform_5, window_bounds = array<i64: 16, 10>}]} {
    %c0 = arith.constant 0 : index
    %c0_0 = arith.constant 0 : index
    %0 = vector.load %arg1[%c0, %c0_0] : memref<16x784xf32, #tpu.memory_space<vmem>>, vector<16x784xf32>
    %1 = arith.truncf %0 : vector<16x784xf32> to vector<16x784xbf16>
    %c0_1 = arith.constant 0 : index
    %c0_2 = arith.constant 0 : index
    %2 = vector.load %arg2[%c0_1, %c0_2] : memref<784x128xbf16, #tpu.memory_space<vmem>>, vector<784x128xbf16>
    %cst = arith.constant dense<0.000000e+00> : vector<16x128xf32>
    %3 = tpu.matmul %1, %2, %cst {dimension_numbers = #tpu.dot_dimension_numbers<[1], [0], [0], [1], [0, 0, 1, 1], [], []>} : vector<16x784xbf16>, vector<784x128xbf16>, vector<16x128xf32> -> vector<16x128xf32>
    %c0_3 = arith.constant 0 : index
    %c0_4 = arith.constant 0 : index
    %4 = vector.load %arg3[%c0_3, %c0_4] : memref<1x128xf32, #tpu.memory_space<vmem>>, vector<1x128xf32>
    %5 = vector.broadcast %4 : vector<1x128xf32> to vector<16x128xf32>
    %6 = arith.addf %3, %5 : vector<16x128xf32>
    %7 = math.tanh %6 : vector<16x128xf32>
    %8 = arith.truncf %7 : vector<16x128xf32> to vector<16x128xbf16>
    %c0_5 = arith.constant 0 : index
    %c0_6 = arith.constant 0 : index
    %9 = vector.load %arg4[%c0_5, %c0_6] : memref<128x10xbf16, #tpu.memory_space<vmem>>, vector<128x10xbf16>
    %cst_7 = arith.constant dense<0.000000e+00> : vector<16x10xf32>
    %10 = tpu.matmul %8, %9, %cst_7 {dimension_numbers = #tpu.dot_dimension_numbers<[1], [0], [0], [1], [0, 0, 1, 1], [], []>} : vector<16x128xbf16>, vector<128x10xbf16>, vector<16x10xf32> -> vector<16x10xf32>
    %c0_8 = arith.constant 0 : index
    %c0_9 = arith.constant 0 : index
    %11 = vector.load %arg5[%c0_8, %c0_9] : memref<1x10xf32, #tpu.memory_space<vmem>>, vector<1x10xf32>
    %12 = vector.broadcast %11 : vector<1x10xf32> to vector<16x10xf32>
    %13 = arith.addf %10, %12 : vector<16x10xf32>
    %14 = math.tanh %13 : vector<16x10xf32>
    %cst_10 = arith.constant dense<0xFF800000> : vector<16xf32>
    %15 = vector.multi_reduction <maximumf>, %14, %cst_10 [1] : vector<16x10xf32> to vector<16xf32>
    %16 = vector.shape_cast %15 : vector<16xf32> to vector<16x1xf32>
    %17 = vector.broadcast %16 : vector<16x1xf32> to vector<16x10xf32>
    %18 = arith.subf %14, %17 : vector<16x10xf32>
    %19 = math.exp %18 : vector<16x10xf32>
    %cst_11 = arith.constant dense<0.000000e+00> : vector<16xf32>
    %20 = vector.multi_reduction <add>, %19, %cst_11 [1] : vector<16x10xf32> to vector<16xf32>
    %21 = vector.shape_cast %20 : vector<16xf32> to vector<16x1xf32>
    %22 = math.log %21 : vector<16x1xf32>
    %23 = vector.broadcast %22 : vector<16x1xf32> to vector<16x10xf32>
    %24 = arith.subf %18, %23 : vector<16x10xf32>
    %c0_12 = arith.constant 0 : index
    %c0_13 = arith.constant 0 : index
    %25 = vector.load %arg6[%c0_12, %c0_13] : memref<16x10xf32, #tpu.memory_space<vmem>>, vector<16x10xf32>
    tpu.vector_store %arg6[%c0_12, %c0_13], %24 {strides = array<i32>} : memref<16x10xf32, #tpu.memory_space<vmem>>, vector<16x10xf32>,
    return
  }
  func.func @transform_0(%arg0: i32) -> (i32, i32) {
    %c0_i32 = arith.constant 0 : i32
    %c0_i32_0 = arith.constant 0 : i32
    return %arg0, %c0_i32 : i32, i32
  }
  func.func @transform_1(%arg0: i32) -> (i32, i32) {
    %c0_i32 = arith.constant 0 : i32
    %c0_i32_0 = arith.constant 0 : i32
    %c0_i32_1 = arith.constant 0 : i32
    return %c0_i32, %c0_i32_0 : i32, i32
  }
  func.func @transform_2(%arg0: i32) -> (i32, i32) {
    %c0_i32 = arith.constant 0 : i32
    %c0_i32_0 = arith.constant 0 : i32
    %c0_i32_1 = arith.constant 0 : i32
    return %c0_i32, %c0_i32_0 : i32, i32
  }
  func.func @transform_3(%arg0: i32) -> (i32, i32) {
    %c0_i32 = arith.constant 0 : i32
    %c0_i32_0 = arith.constant 0 : i32
    %c0_i32_1 = arith.constant 0 : i32
    return %c0_i32, %c0_i32_0 : i32, i32
  }
  func.func @transform_4(%arg0: i32) -> (i32, i32) {
    %c0_i32 = arith.constant 0 : i32
    %c0_i32_0 = arith.constant 0 : i32
    %c0_i32_1 = arith.constant 0 : i32
    return %c0_i32, %c0_i32_0 : i32, i32
  }
  func.func @transform_5(%arg0: i32) -> (i32, i32) {
    %c0_i32 = arith.constant 0 : i32
    %c0_i32_0 = arith.constant 0 : i32
    return %arg0, %c0_i32 : i32, i32
  }
}

</mosaic_0001>

<llo_original>
// kernel: tpu_custom_call.1
$region0: #{tpu_custom_call.1}
  #allocation0 [shape = 'u32[]', space=smem, size = 0x4, offset = 0x4, fixed_abs, tag = 'smem constant byte address 0x4 - core index']
  #allocation1 [shape = 'u32[144,128]{1,0:T(1,128)}', space=vmem, size = 0x12000, scoped, tag = 'internal scratch']
  %s0 = inlined_call_operand.hbm [shape: f32[16,784], index: 0, kind: input, shape index: {}]
  %s1 = inlined_call_operand.hbm [shape: bf16[784,128], index: 1, kind: input, shape index: {}]
  %s2 = inlined_call_operand.vmem [shape: f32[1,128], index: 2, kind: input, shape index: {}]
  %s3 = inlined_call_operand.vmem [shape: bf16[128,10], index: 3, kind: input, shape index: {}]
  %s4 = inlined_call_operand.vmem [shape: f32[1,10], index: 4, kind: input, shape index: {}]
  %s5 = inlined_call_operand.hbm [shape: f32[16,10], index: 5, kind: output, shape index: {}]
  %s6 = sld [smem:[#allocation0]]
  $region38: #{tpu_custom_call.1} parent=0
    _
  %s8 = ssub.s32 1, %s6
  %s9 = scalar_select 0, %s8, %s6
  $region1: #{tpu_custom_call.1} parent=0
    #allocation2 [shape = 'u8[57344]{0}', space=vmem, size = 0xe000, scoped, tag = 'input window, operand 0, single buffered']
    #allocation3 [shape = 's32[1]{0}', space=sflag, size = 0x4, scoped, tag = 'scoped memory for tpu_custom_call.1']
    #allocation4 [shape = 's32[1]{0}', space=sflag, size = 0x4, scoped, tag = 'scoped memory for tpu_custom_call.1']
    #allocation5 [shape = 'u8[200704]{0}', space=vmem, size = 0x31000, scoped, tag = 'input window, operand 1, single buffered']
    #allocation6 [shape = 's32[1]{0}', space=sflag, size = 0x4, scoped, tag = 'scoped memory for tpu_custom_call.1']
    #allocation7 [shape = 'u8[8192]{0}', space=vmem, size = 0x2000, scoped, tag = 'output window, operand 0, single buffered']
    %10 = vsyncpa [#allocation3], 0
    %11 = vsyncpa [#allocation6], 0
    %12 = vsyncpa [#allocation4], 0
    // Predicated region
    $region2: #{tpu_custom_call.1} parent=1 // pred_check
      _
    $region3: #{tpu_custom_call.1} parent=1 // pred_check_branch
      %14 = sbr.rel (0) target = $region5
    $region4: #{tpu_custom_call.1} parent=1 // pred_region
      %s16 = ssub.s32 1792, 1792
      %17 = vsyncadd [#allocation3], %s16
      %s18 = sshll.u32 [#allocation2], 4
      %s19 = int_to_ptr.vmem [resolvable:$true] %s18
      %24 = dma.hbm_to_vmem [thread:$0]  %s0, 1792, %s19, [#allocation3], 896, 896, 56
    $region5: #{tpu_custom_call.1} parent=1 // pred_fallthru
      _
    // Predicated region
    $region6: #{tpu_custom_call.1} parent=1 // pred_check
      _
    $region7: #{tpu_custom_call.1} parent=1 // pred_check_branch
      %26 = sbr.rel (0) target = $region9
    $region8: #{tpu_custom_call.1} parent=1 // pred_region
      %s28 = ssub.s32 6272, 6272
      %29 = vsyncadd [#allocation6], %s28
      %s30 = sshll.u32 [#allocation5], 4
      %s31 = int_to_ptr.vmem [resolvable:$true] %s30
      %36 = dma.hbm_to_vmem [thread:$0]  %s1, 6272, %s31, [#allocation6], 64, 64, 4
    $region9: #{tpu_custom_call.1} parent=1 // pred_fallthru
      _
    // Predicated region
    $region10: #{tpu_custom_call.1} parent=1 // pred_check
      _
    $region11: #{tpu_custom_call.1} parent=1 // pred_check_branch
      %38 = sbr.rel (0) target = $region13
    $region12: #{tpu_custom_call.1} parent=1 // pred_region
      _
    $region13: #{tpu_custom_call.1} parent=1 // pred_fallthru
      _
    // Predicated region
    $region14: #{tpu_custom_call.1} parent=1 // pred_check
      _
    $region15: #{tpu_custom_call.1} parent=1 // pred_check_branch
      %40 = sbr.rel (0) target = $region17
    $region16: #{tpu_custom_call.1} parent=1 // pred_region
      _
    $region17: #{tpu_custom_call.1} parent=1 // pred_fallthru
      _
    // Predicated region
    $region18: #{tpu_custom_call.1} parent=1 // pred_check
      _
    $region19: #{tpu_custom_call.1} parent=1 // pred_check_branch
      %42 = sbr.rel (0) target = $region21
    $region20: #{tpu_custom_call.1} parent=1 // pred_region
      _
    $region21: #{tpu_custom_call.1} parent=1 // pred_fallthru
      _
    // Predicated region
    $region22: #{tpu_custom_call.1} parent=1 // pred_check
      _
    $region23: #{tpu_custom_call.1} parent=1 // pred_check_branch
      %44 = sbr.rel (0) target = $region25
    $region24: #{tpu_custom_call.1} parent=1 // pred_region
      %45 = dma.done [#allocation3], 1792
    $region25: #{tpu_custom_call.1} parent=1 // pred_fallthru
      _
    // Predicated region
    $region26: #{tpu_custom_call.1} parent=1 // pred_check
      _
    $region27: #{tpu_custom_call.1} parent=1 // pred_check_branch
      %47 = sbr.rel (0) target = $region29
    $region28: #{tpu_custom_call.1} parent=1 // pred_region
      %48 = dma.done [#allocation6], 6272
    $region29: #{tpu_custom_call.1} parent=1 // pred_fallthru
      _
    %v50 = vld [vmem:[#allocation2] sm:$0xff]
    %v51 = vld [vmem:[#allocation2 + $0x8] sm:$0xff]
    %v52 = vld [vmem:[#allocation2 + $0x10] sm:$0xff]
    %v53 = vld [vmem:[#allocation2 + $0x18] sm:$0xff]
    %v54 = vld [vmem:[#allocation2 + $0x20] sm:$0xff]
    %v55 = vld [vmem:[#allocation2 + $0x28] sm:$0xff]
    %v56 = vld [vmem:[#allocation2 + $0x30] sm:$0xff]
    %v57 = vld [vmem:[#allocation2 + $0x38] sm:$0xff]
    %v58 = vld [vmem:[#allocation2 + $0x40] sm:$0xff]
    %v59 = vld [vmem:[#allocation2 + $0x48] sm:$0xff]
    %v60 = vld [vmem:[#allocation2 + $0x50] sm:$0xff]
    %v61 = vld [vmem:[#allocation2 + $0x58] sm:$0xff]
    %v62 = vld [vmem:[#allocation2 + $0x60] sm:$0xff]
    %v63 = vld [vmem:[#allocation2 + $0x68] sm:$0xff]
    %v64 = vpack.c.bf16 %v57, %v50
    %v65 = vpack.c.bf16 %v58, %v51
    %v66 = vpack.c.bf16 %v59, %v52
    %v67 = vpack.c.bf16 %v60, %v53
    %v68 = vpack.c.bf16 %v61, %v54
    %v69 = vpack.c.bf16 %v62, %v55
    %v70 = vpack.c.bf16 %v63, %v56
    %v71 = vld [vmem:[#allocation5] sm:$0xf]
    %v72 = vld [vmem:[#allocation5 + $0x4] sm:$0xf]
    %v73 = vld [vmem:[#allocation5 + $0x8] sm:$0xf]
    %v74 = vld [vmem:[#allocation5 + $0xc] sm:$0xf]
    %v75 = vld [vmem:[#allocation5 + $0x10] sm:$0xf]
    %v76 = vld [vmem:[#allocation5 + $0x14] sm:$0xf]
    %v77 = vld [vmem:[#allocation5 + $0x18] sm:$0xf]
    %v78 = vld [vmem:[#allocation5 + $0x1c] sm:$0xf]
    %v79 = vld [vmem:[#allocation5 + $0x20] sm:$0xf]
    %v80 = vld [vmem:[#allocation5 + $0x24] sm:$0xf]
    %v81 = vld [vmem:[#allocation5 + $0x28] sm:$0xf]
    %v82 = vld [vmem:[#allocation5 + $0x2c] sm:$0xf]
    %v83 = vld [vmem:[#allocation5 + $0x30] sm:$0xf]
    %v84 = vld [vmem:[#allocation5 + $0x34] sm:$0xf]
    %v85 = vld [vmem:[#allocation5 + $0x38] sm:$0xf]
    %v86 = vld [vmem:[#allocation5 + $0x3c] sm:$0xf]
    %v87 = vld [vmem:[#allocation5 + $0x40] sm:$0xf]
    %v88 = vld [vmem:[#allocation5 + $0x44] sm:$0xf]
    %v89 = vld [vmem:[#allocation5 + $0x48] sm:$0xf]
    %v90 = vld [vmem:[#allocation5 + $0x4c] sm:$0xf]
    %v91 = vld [vmem:[#allocation5 + $0x50] sm:$0xf]
    %v92 = vld [vmem:[#allocation5 + $0x54] sm:$0xf]
    %v93 = vld [vmem:[#allocation5 + $0x58] sm:$0xf]
    %v94 = vld [vmem:[#allocation5 + $0x5c] sm:$0xf]
    %v95 = vld [vmem:[#allocation5 + $0x60] sm:$0xf]
    %v96 = vld [vmem:[#allocation5 + $0x64] sm:$0xf]
    %v97 = vld [vmem:[#allocation5 + $0x68] sm:$0xf]
    %v98 = vld [vmem:[#allocation5 + $0x6c] sm:$0xf]
    %v99 = vld [vmem:[#allocation5 + $0x70] sm:$0xf]
    %v100 = vld [vmem:[#allocation5 + $0x74] sm:$0xf]
    %v101 = vld [vmem:[#allocation5 + $0x78] sm:$0xf]
    %v102 = vld [vmem:[#allocation5 + $0x7c] sm:$0xf]
    %v103 = vld [vmem:[#allocation5 + $0x80] sm:$0xf]
    %v104 = vld [vmem:[#allocation5 + $0x84] sm:$0xf]
    %v105 = vld [vmem:[#allocation5 + $0x88] sm:$0xf]
    %v106 = vld [vmem:[#allocation5 + $0x8c] sm:$0xf]
    %v107 = vld [vmem:[#allocation5 + $0x90] sm:$0xf]
    %v108 = vld [vmem:[#allocation5 + $0x94] sm:$0xf]
    %v109 = vld [vmem:[#allocation5 + $0x98] sm:$0xf]
    %v110 = vld [vmem:[#allocation5 + $0x9c] sm:$0xf]
    %v111 = vld [vmem:[#allocation5 + $0xa0] sm:$0xf]
    %v112 = vld [vmem:[#allocation5 + $0xa4] sm:$0xf]
    %v113 = vld [vmem:[#allocation5 + $0xa8] sm:$0xf]
    %v114 = vld [vmem:[#allocation5 + $0xac] sm:$0xf]
    %v115 = vld [vmem:[#allocation5 + $0xb0] sm:$0xf]
    %v116 = vld [vmem:[#allocation5 + $0xb4] sm:$0xf]
    %v117 = vld [vmem:[#allocation5 + $0xb8] sm:$0xf]
    %v118 = vld [vmem:[#allocation5 + $0xbc] sm:$0xf]
    %v119 = vld [vmem:[#allocation5 + $0xc0] sm:$0xf]
    %v120 = vld [vmem:[#allocation5 + $0xc4] sm:$0xf]
    %v121 = vld [vmem:[#allocation5 + $0xc8] sm:$0xf]
    %v122 = vld [vmem:[#allocation5 + $0xcc] sm:$0xf]
    %v123 = vld [vmem:[#allocation5 + $0xd0] sm:$0xf]
    %v124 = vld [vmem:[#allocation5 + $0xd4] sm:$0xf]
    %v125 = vld [vmem:[#allocation5 + $0xd8] sm:$0xf]
    %v126 = vld [vmem:[#allocation5 + $0xdc] sm:$0xf]
    %v127 = vld [vmem:[#allocation5 + $0xe0] sm:$0xf]
    %v128 = vld [vmem:[#allocation5 + $0xe4] sm:$0xf]
    %v129 = vld [vmem:[#allocation5 + $0xe8] sm:$0xf]
    %v130 = vld [vmem:[#allocation5 + $0xec] sm:$0xf]
    %v131 = vld [vmem:[#allocation5 + $0xf0] sm:$0xf]
    %v132 = vld [vmem:[#allocation5 + $0xf4] sm:$0xf]
    %v133 = vld [vmem:[#allocation5 + $0xf8] sm:$0xf]
    %v134 = vld [vmem:[#allocation5 + $0xfc] sm:$0xf]
    %v135 = vld [vmem:[#allocation5 + $0x100] sm:$0xf]
    %v136 = vld [vmem:[#allocation5 + $0x104] sm:$0xf]
    %v137 = vld [vmem:[#allocation5 + $0x108] sm:$0xf]
    %v138 = vld [vmem:[#allocation5 + $0x10c] sm:$0xf]
    %v139 = vld [vmem:[#allocation5 + $0x110] sm:$0xf]
    %v140 = vld [vmem:[#allocation5 + $0x114] sm:$0xf]
    %v141 = vld [vmem:[#allocation5 + $0x118] sm:$0xf]
    %v142 = vld [vmem:[#allocation5 + $0x11c] sm:$0xf]
    %v143 = vld [vmem:[#allocation5 + $0x120] sm:$0xf]
    %v144 = vld [vmem:[#allocation5 + $0x124] sm:$0xf]
    %v145 = vld [vmem:[#allocation5 + $0x128] sm:$0xf]
    %v146 = vld [vmem:[#allocation5 + $0x12c] sm:$0xf]
    %v147 = vld [vmem:[#allocation5 + $0x130] sm:$0xf]
    %v148 = vld [vmem:[#allocation5 + $0x134] sm:$0xf]
    %v149 = vld [vmem:[#allocation5 + $0x138] sm:$0xf]
    %v150 = vld [vmem:[#allocation5 + $0x13c] sm:$0xf]
    %v151 = vld [vmem:[#allocation5 + $0x140] sm:$0xf]
    %v152 = vld [vmem:[#allocation5 + $0x144] sm:$0xf]
    %v153 = vld [vmem:[#allocation5 + $0x148] sm:$0xf]
    %v154 = vld [vmem:[#allocation5 + $0x14c] sm:$0xf]
    %v155 = vld [vmem:[#allocation5 + $0x150] sm:$0xf]
    %v156 = vld [vmem:[#allocation5 + $0x154] sm:$0xf]
    %v157 = vld [vmem:[#allocation5 + $0x158] sm:$0xf]
    %v158 = vld [vmem:[#allocation5 + $0x15c] sm:$0xf]
    %v159 = vld [vmem:[#allocation5 + $0x160] sm:$0xf]
    %v160 = vld [vmem:[#allocation5 + $0x164] sm:$0xf]
    %v161 = vld [vmem:[#allocation5 + $0x168] sm:$0xf]
    %v162 = vld [vmem:[#allocation5 + $0x16c] sm:$0xf]
    %v163 = vld [vmem:[#allocation5 + $0x170] sm:$0xf]
    %v164 = vld [vmem:[#allocation5 + $0x174] sm:$0xf]
    %v165 = vld [vmem:[#allocation5 + $0x178] sm:$0xf]
    %v166 = vld [vmem:[#allocation5 + $0x17c] sm:$0xf]
    %v167 = vld [vmem:[#allocation5 + $0x180] sm:$0xf]
    %v168 = vld [vmem:[#allocation5 + $0x184] sm:$0xf]
    %v169 = vld [vmem:[%s2] sm:$0x1]
    %v171 = vlaneseq
    %v172 = vshrl.u32 %v171, 7
    %v173 = vsub.s32 0, %v172
    %v174 = vrot.slane %v169, %v173
    %v274 = vunpack.c.l.b16 %v71
    %v275 = vunpack.c.l.b16 %v72
    %v276 = vunpack.c.l.b16 %v73
    %v277 = vunpack.c.l.b16 %v74
    %v278 = vunpack.c.l.b16 %v75
    %v279 = vunpack.c.l.b16 %v76
    %v280 = vunpack.c.l.b16 %v77
    %v281 = vunpack.c.l.b16 %v78
    %v282 = vunpack.c.l.b16 %v79
    %v283 = vunpack.c.l.b16 %v80
    %v284 = vunpack.c.l.b16 %v81
    %v285 = vunpack.c.l.b16 %v82
    %v286 = vunpack.c.l.b16 %v83
    %v287 = vunpack.c.l.b16 %v84
    %v288 = vunpack.c.l.b16 %v85
    %v289 = vunpack.c.l.b16 %v86
    %v290 = vunpack.c.l.b16 %v87
    %v291 = vunpack.c.l.b16 %v88
    %v292 = vunpack.c.l.b16 %v89
    %v293 = vunpack.c.l.b16 %v90
    %v294 = vunpack.c.l.b16 %v91
    %v295 = vunpack.c.l.b16 %v92
    %v296 = vunpack.c.l.b16 %v93
    %v297 = vunpack.c.l.b16 %v94
    %v298 = vunpack.c.l.b16 %v95
    %v299 = vunpack.c.l.b16 %v96
    %v300 = vunpack.c.l.b16 %v97
    %v301 = vunpack.c.l.b16 %v98
    %v302 = vunpack.c.l.b16 %v99
    %v303 = vunpack.c.l.b16 %v100
    %v304 = vunpack.c.l.b16 %v101
    %v305 = vunpack.c.l.b16 %v102
    %v306 = vunpack.c.l.b16 %v103
    %v307 = vunpack.c.l.b16 %v104
    %v308 = vunpack.c.l.b16 %v105
    %v309 = vunpack.c.l.b16 %v106
    %v310 = vunpack.c.l.b16 %v107
    %v311 = vunpack.c.l.b16 %v108
    %v312 = vunpack.c.l.b16 %v109
    %v313 = vunpack.c.l.b16 %v110
    %v314 = vunpack.c.l.b16 %v111
    %v315 = vunpack.c.l.b16 %v112
    %v316 = vunpack.c.l.b16 %v113
    %v317 = vunpack.c.l.b16 %v114
    %v318 = vunpack.c.l.b16 %v115
    %v319 = vunpack.c.l.b16 %v116
    %v320 = vunpack.c.l.b16 %v117
    %v321 = vunpack.c.l.b16 %v118
    %v322 = vunpack.c.l.b16 %v119
    %v323 = vunpack.c.l.b16 %v120
    %v324 = vunpack.c.l.b16 %v121
    %v325 = vunpack.c.l.b16 %v122
    %v326 = vunpack.c.l.b16 %v123
    %v327 = vunpack.c.l.b16 %v124
    %v328 = vunpack.c.l.b16 %v125
    %v329 = vunpack.c.l.b16 %v126
    %v330 = vunpack.c.l.b16 %v127
    %v331 = vunpack.c.l.b16 %v128
    %v332 = vunpack.c.l.b16 %v129
    %v333 = vunpack.c.l.b16 %v130
    %v334 = vunpack.c.l.b16 %v131
    %v335 = vunpack.c.l.b16 %v132
    %v336 = vunpack.c.l.b16 %v133
    %v337 = vunpack.c.l.b16 %v134
    %v338 = vunpack.c.l.b16 %v135
    %v339 = vunpack.c.l.b16 %v136
    %v340 = vunpack.c.l.b16 %v137
    %v341 = vunpack.c.l.b16 %v138
    %v342 = vunpack.c.l.b16 %v139
    %v343 = vunpack.c.l.b16 %v140
    %v344 = vunpack.c.l.b16 %v141
    %v345 = vunpack.c.l.b16 %v142
    %v346 = vunpack.c.l.b16 %v143
    %v347 = vunpack.c.l.b16 %v144
    %v348 = vunpack.c.l.b16 %v145
    %v349 = vunpack.c.l.b16 %v146
    %v350 = vunpack.c.l.b16 %v147
    %v351 = vunpack.c.l.b16 %v148
    %v352 = vunpack.c.l.b16 %v149
    %v353 = vunpack.c.l.b16 %v150
    %v354 = vunpack.c.l.b16 %v151
    %v355 = vunpack.c.l.b16 %v152
    %v356 = vunpack.c.l.b16 %v153
    %v357 = vunpack.c.l.b16 %v154
    %v358 = vunpack.c.l.b16 %v155
    %v359 = vunpack.c.l.b16 %v156
    %v360 = vunpack.c.l.b16 %v157
    %v361 = vunpack.c.l.b16 %v158
    %v362 = vunpack.c.l.b16 %v159
    %v363 = vunpack.c.l.b16 %v160
    %v364 = vunpack.c.l.b16 %v161
    %v365 = vunpack.c.l.b16 %v162
    %v366 = vunpack.c.l.b16 %v163
    %v367 = vunpack.c.l.b16 %v164
    %v368 = vunpack.c.l.b16 %v165
    %v369 = vunpack.c.l.b16 %v166
    %v370 = vunpack.c.l.b16 %v167
    %v371 = vunpack.c.l.b16 %v168
    %v372 = vpack.c.b16 %v275, %v274
    %v373 = vpack.c.b16 %v277, %v276
    %v374 = vpack.c.b16 %v279, %v278
    %v375 = vpack.c.b16 %v281, %v280
    %v376 = vpack.c.b16 %v283, %v282
    %v377 = vpack.c.b16 %v285, %v284
    %v378 = vpack.c.b16 %v287, %v286
    %v379 = vpack.c.b16 %v289, %v288
    %v380 = vpack.c.b16 %v291, %v290
    %v381 = vpack.c.b16 %v293, %v292
    %v382 = vpack.c.b16 %v295, %v294
    %v383 = vpack.c.b16 %v297, %v296
    %v384 = vpack.c.b16 %v299, %v298
    %v385 = vpack.c.b16 %v301, %v300
    %v386 = vpack.c.b16 %v303, %v302
    %v387 = vpack.c.b16 %v305, %v304
    %v388 = vpack.c.b16 %v307, %v306
    %v389 = vpack.c.b16 %v309, %v308
    %v390 = vpack.c.b16 %v311, %v310
    %v391 = vpack.c.b16 %v313, %v312
    %v392 = vpack.c.b16 %v315, %v314
    %v393 = vpack.c.b16 %v317, %v316
    %v394 = vpack.c.b16 %v319, %v318
    %v395 = vpack.c.b16 %v321, %v320
    %v396 = vpack.c.b16 %v323, %v322
    %v397 = vpack.c.b16 %v325, %v324
    %v398 = vpack.c.b16 %v327, %v326
    %v399 = vpack.c.b16 %v329, %v328
    %v400 = vpack.c.b16 %v331, %v330
    %v401 = vpack.c.b16 %v333, %v332
    %v402 = vpack.c.b16 %v335, %v334
    %v403 = vpack.c.b16 %v337, %v336
    %v404 = vpack.c.b16 %v339, %v338
    %v405 = vpack.c.b16 %v341, %v340
    %v406 = vpack.c.b16 %v343, %v342
    %v407 = vpack.c.b16 %v345, %v344
    %v408 = vpack.c.b16 %v347, %v346
    %v409 = vpack.c.b16 %v349, %v348
    %v410 = vpack.c.b16 %v351, %v350
    %v411 = vpack.c.b16 %v353, %v352
    %v412 = vpack.c.b16 %v355, %v354
    %v413 = vpack.c.b16 %v357, %v356
    %v414 = vpack.c.b16 %v359, %v358
    %v415 = vpack.c.b16 %v361, %v360
    %v416 = vpack.c.b16 %v363, %v362
    %v417 = vpack.c.b16 %v365, %v364
    %v418 = vpack.c.b16 %v367, %v366
    %v419 = vpack.c.b16 %v369, %v368
    %v420 = vpack.c.b16 %v371, %v370
    %vm470 = vcmask 130048
    %v472 = vsel %vm470, %v70, 0
    %474 = vmatprep.subr.bf16.mxu0 0
    %475 = vmatpush1.bf16.msra.mxu0 %v372
    %476 = vmatprep.subr.bf16.mxu0 0
    %477 = vmatpush1.bf16.msra.mxu0 %v373
    %478 = vmatprep.subr.bf16.mxu0 0
    %479 = vmatpush1.bf16.msra.mxu0 %v374
    %480 = vmatprep.subr.bf16.mxu0 0
    %481 = vmatpush1.bf16.msra.mxu0 %v375
    %482 = vmatprep.subr.bf16.mxu0 0
    %483 = vmatpush1.bf16.msra.mxu0 %v376
    %484 = vmatprep.subr.bf16.mxu0 0
    %485 = vmatpush1.bf16.msra.mxu0 %v377
    %486 = vmatprep.subr.bf16.mxu0 0
    %487 = vmatpush1.bf16.msra.mxu0 %v378
    %488 = vmatprep.subr.bf16.mxu0 0
    %489 = vmatpush1.bf16.msra.mxu0 %v379
    %490 = vmatprep.subr.bf16.mxu0 0
    %491 = vmatpush1.bf16.msra.mxu0 %v380
    %492 = vmatprep.subr.bf16.mxu0 0
    %493 = vmatpush1.bf16.msra.mxu0 %v381
    %494 = vmatprep.subr.bf16.mxu0 0
    %495 = vmatpush1.bf16.msra.mxu0 %v382
    %496 = vmatprep.subr.bf16.mxu0 0
    %497 = vmatpush1.bf16.msra.mxu0 %v383
    %498 = vmatprep.subr.bf16.mxu0 0
    %499 = vmatpush1.bf16.msra.mxu0 %v384
    %500 = vmatprep.subr.bf16.mxu0 0
    %501 = vmatpush1.bf16.msra.mxu0 %v385
    %502 = vmatprep.subr.bf16.mxu0 0
    %503 = vmatpush1.bf16.msra.mxu0 %v386
    %504 = vmatprep.subr.bf16.mxu0 0
    %505 = vmatpush1.bf16.msra.mxu0 %v387
    %506 = vmatprep.mubr.bf16.mxu0 %v65
    %507 = vmatmul.mubr.bf16.gmra.mrb[0].mxu0 %v64
    %v508 = vpop.f32.mrb[0].mxu0
    %v509 = vadd.f32 %v174, %v508
    %v510 = vpop.f32.mrb[0].mxu0
    %v511 = vpop.f32.mrb[0].mxu0
    %v512 = vadd.f32 %v174, %v511
    %v513 = vpop.f32.mrb[0].mxu0
    %514 = vdwg.mxu0
    %515 = vmatprep.subr.bf16.mxu0 0
    %516 = vmatpush1.bf16.msra.mxu0 %v388
    %517 = vmatprep.subr.bf16.mxu0 0
    %518 = vmatpush1.bf16.msra.mxu0 %v389
    %519 = vmatprep.subr.bf16.mxu0 0
    %520 = vmatpush1.bf16.msra.mxu0 %v390
    %521 = vmatprep.subr.bf16.mxu0 0
    %522 = vmatpush1.bf16.msra.mxu0 %v391
    %523 = vmatprep.subr.bf16.mxu0 0
    %524 = vmatpush1.bf16.msra.mxu0 %v392
    %525 = vmatprep.subr.bf16.mxu0 0
    %526 = vmatpush1.bf16.msra.mxu0 %v393
    %527 = vmatprep.subr.bf16.mxu0 0
    %528 = vmatpush1.bf16.msra.mxu0 %v394
    %529 = vmatprep.subr.bf16.mxu0 0
    %530 = vmatpush1.bf16.msra.mxu0 %v395
    %531 = vmatprep.subr.bf16.mxu0 0
    %532 = vmatpush1.bf16.msra.mxu0 %v396
    %533 = vmatprep.subr.bf16.mxu0 0
    %534 = vmatpush1.bf16.msra.mxu0 %v397
    %535 = vmatprep.subr.bf16.mxu0 0
    %536 = vmatpush1.bf16.msra.mxu0 %v398
    %537 = vmatprep.subr.bf16.mxu0 0
    %538 = vmatpush1.bf16.msra.mxu0 %v399
    %539 = vmatprep.subr.bf16.mxu0 0
    %540 = vmatpush1.bf16.msra.mxu0 %v400
    %541 = vmatprep.subr.bf16.mxu0 0
    %542 = vmatpush1.bf16.msra.mxu0 %v401
    %543 = vmatprep.subr.bf16.mxu0 0
    %544 = vmatpush1.bf16.msra.mxu0 %v402
    %545 = vmatprep.subr.bf16.mxu0 0
    %546 = vmatpush1.bf16.msra.mxu0 %v403
    %547 = vmatprep.mubr.bf16.mxu0 %v67
    %548 = vmatmul.mubr.bf16.gmra.mrb[0].mxu0 %v66
    %v549 = vpop.f32.mrb[0].mxu0
    %v550 = vadd.f32 %v509, %v549
    %v551 = vpop.f32.mrb[0].mxu0
    %v552 = vpop.f32.mrb[0].mxu0
    %v553 = vadd.f32 %v512, %v552
    %v554 = vpop.f32.mrb[0].mxu0
    %555 = vdwg.mxu0
    %556 = vmatprep.subr.bf16.mxu0 0
    %557 = vmatpush1.bf16.msra.mxu0 %v404
    %558 = vmatprep.subr.bf16.mxu0 0
    %559 = vmatpush1.bf16.msra.mxu0 %v405
    %560 = vmatprep.subr.bf16.mxu0 0
    %561 = vmatpush1.bf16.msra.mxu0 %v406
    %562 = vmatprep.subr.bf16.mxu0 0
    %563 = vmatpush1.bf16.msra.mxu0 %v407
    %564 = vmatprep.subr.bf16.mxu0 0
    %565 = vmatpush1.bf16.msra.mxu0 %v408
    %566 = vmatprep.subr.bf16.mxu0 0
    %567 = vmatpush1.bf16.msra.mxu0 %v409
    %568 = vmatprep.subr.bf16.mxu0 0
    %569 = vmatpush1.bf16.msra.mxu0 %v410
    %570 = vmatprep.subr.bf16.mxu0 0
    %571 = vmatpush1.bf16.msra.mxu0 %v411
    %572 = vmatprep.subr.bf16.mxu0 0
    %573 = vmatpush1.bf16.msra.mxu0 %v412
    %574 = vmatprep.subr.bf16.mxu0 0
    %575 = vmatpush1.bf16.msra.mxu0 %v413
    %576 = vmatprep.subr.bf16.mxu0 0
    %577 = vmatpush1.bf16.msra.mxu0 %v414
    %578 = vmatprep.subr.bf16.mxu0 0
    %579 = vmatpush1.bf16.msra.mxu0 %v415
    %580 = vmatprep.subr.bf16.mxu0 0
    %581 = vmatpush1.bf16.msra.mxu0 %v416
    %582 = vmatprep.subr.bf16.mxu0 0
    %583 = vmatpush1.bf16.msra.mxu0 %v417
    %584 = vmatprep.subr.bf16.mxu0 0
    %585 = vmatpush1.bf16.msra.mxu0 %v418
    %586 = vmatprep.subr.bf16.mxu0 0
    %587 = vmatpush1.bf16.msra.mxu0 %v419
    %588 = vmatprep.mubr.bf16.mxu0 %v69
    %589 = vmatmul.mubr.bf16.gmra.mrb[0].mxu0 %v68
    %v590 = vpop.f32.mrb[0].mxu0
    %v591 = vadd.f32 %v550, %v590
    %v592 = vpop.f32.mrb[0].mxu0
    %v593 = vpop.f32.mrb[0].mxu0
    %v594 = vadd.f32 %v553, %v593
    %v595 = vpop.f32.mrb[0].mxu0
    %596 = vdwg.mxu0
    %597 = vmatprep.subr.bf16.mxu0 0
    %598 = vmatpush1.bf16.msra.mxu0 %v420
    %599 = vmatprep.subr.bf16.mxu0 0
    %600 = vmatpush1.bf16.msra.mxu0 0
    %601 = vmatprep.subr.bf16.mxu0 0
    %602 = vmatpush1.bf16.msra.mxu0 0
    %603 = vmatprep.subr.bf16.mxu0 0
    %604 = vmatpush1.bf16.msra.mxu0 0
    %605 = vmatprep.subr.bf16.mxu0 0
    %606 = vmatpush1.bf16.msra.mxu0 0
    %607 = vmatprep.subr.bf16.mxu0 0
    %608 = vmatpush1.bf16.msra.mxu0 0
    %609 = vmatprep.subr.bf16.mxu0 0
    %610 = vmatpush1.bf16.msra.mxu0 0
    %611 = vmatprep.subr.bf16.mxu0 0
    %612 = vmatpush1.bf16.msra.mxu0 0
    %613 = vmatprep.subr.bf16.mxu0 0
    %614 = vmatpush1.bf16.msra.mxu0 0
    %615 = vmatprep.subr.bf16.mxu0 0
    %616 = vmatpush1.bf16.msra.mxu0 0
    %617 = vmatprep.subr.bf16.mxu0 0
    %618 = vmatpush1.bf16.msra.mxu0 0
    %619 = vmatprep.subr.bf16.mxu0 0
    %620 = vmatpush1.bf16.msra.mxu0 0
    %621 = vmatprep.subr.bf16.mxu0 0
    %622 = vmatpush1.bf16.msra.mxu0 0
    %623 = vmatprep.subr.bf16.mxu0 0
    %624 = vmatpush1.bf16.msra.mxu0 0
    %625 = vmatprep.subr.bf16.mxu0 0
    %626 = vmatpush1.bf16.msra.mxu0 0
    %627 = vmatprep.subr.bf16.mxu0 0
    %628 = vmatpush1.bf16.msra.mxu0 0
    %629 = vmatprep.mubr.bf16.mxu0 0
    %630 = vmatmul.mubr.bf16.gmra.mrb[0].mxu0 %v472
    %v631 = vpop.f32.mrb[0].mxu0
    %v632 = vadd.f32 %v591, %v631
    %v633 = vpop.f32.mrb[0].mxu0
    %v634 = vpop.f32.mrb[0].mxu0
    %v635 = vadd.f32 %v594, %v634
    %v636 = vpop.f32.mrb[0].mxu0
    %637 = vdwg.mxu0
    %v638 = vtanh.pop %v632
    %v639 = vtanh.pop %v635
    %v640 = vpack.c.bf16 %v639, %v638
    %v641 = vld [vmem:[%s3] sm:$0xf]
    %v642 = vld [vmem:[%s3 + $0x4] sm:$0xf]
    %v643 = vld [vmem:[%s3 + $0x8] sm:$0xf]
    %v644 = vld [vmem:[%s3 + $0xc] sm:$0xf]
    %v645 = vld [vmem:[%s3 + $0x10] sm:$0xf]
    %v646 = vld [vmem:[%s3 + $0x14] sm:$0xf]
    %v647 = vld [vmem:[%s3 + $0x18] sm:$0xf]
    %v648 = vld [vmem:[%s3 + $0x1c] sm:$0xf]
    %v649 = vld [vmem:[%s3 + $0x20] sm:$0xf]
    %v650 = vld [vmem:[%s3 + $0x24] sm:$0xf]
    %v651 = vld [vmem:[%s3 + $0x28] sm:$0xf]
    %v652 = vld [vmem:[%s3 + $0x2c] sm:$0xf]
    %v653 = vld [vmem:[%s3 + $0x30] sm:$0xf]
    %v654 = vld [vmem:[%s3 + $0x34] sm:$0xf]
    %v655 = vld [vmem:[%s3 + $0x38] sm:$0xf]
    %v656 = vld [vmem:[%s3 + $0x3c] sm:$0xf]
    %v657 = vld [vmem:[%s4] sm:$0x1]
    %v659 = vlaneseq
    %v660 = vshrl.u32 %v659, 7
    %v661 = vsub.s32 0, %v660
    %v662 = vrot.slane %v657, %v661
    %v680 = vunpack.c.l.b16 %v641
    %v681 = vunpack.c.l.b16 %v642
    %v682 = vunpack.c.l.b16 %v643
    %v683 = vunpack.c.l.b16 %v644
    %v684 = vunpack.c.l.b16 %v645
    %v685 = vunpack.c.l.b16 %v646
    %v686 = vunpack.c.l.b16 %v647
    %v687 = vunpack.c.l.b16 %v648
    %v688 = vunpack.c.l.b16 %v649
    %v689 = vunpack.c.l.b16 %v650
    %v690 = vunpack.c.l.b16 %v651
    %v691 = vunpack.c.l.b16 %v652
    %v692 = vunpack.c.l.b16 %v653
    %v693 = vunpack.c.l.b16 %v654
    %v694 = vunpack.c.l.b16 %v655
    %v695 = vunpack.c.l.b16 %v656
    %v696 = vpack.c.b16 %v681, %v680
    %v697 = vpack.c.b16 %v683, %v682
    %v698 = vpack.c.b16 %v685, %v684
    %v699 = vpack.c.b16 %v687, %v686
    %v700 = vpack.c.b16 %v689, %v688
    %v701 = vpack.c.b16 %v691, %v690
    %v702 = vpack.c.b16 %v693, %v692
    %v703 = vpack.c.b16 %v695, %v694
    %712 = vmatprep.subr.bf16.mxu0 0
    %713 = vmatpush1.bf16.msra.mxu0 %v696
    %714 = vmatprep.subr.bf16.mxu0 0
    %715 = vmatpush1.bf16.msra.mxu0 %v697
    %716 = vmatprep.subr.bf16.mxu0 0
    %717 = vmatpush1.bf16.msra.mxu0 %v698
    %718 = vmatprep.subr.bf16.mxu0 0
    %719 = vmatpush1.bf16.msra.mxu0 %v699
    %720 = vmatprep.subr.bf16.mxu0 0
    %721 = vmatpush1.bf16.msra.mxu0 %v700
    %722 = vmatprep.subr.bf16.mxu0 0
    %723 = vmatpush1.bf16.msra.mxu0 %v701
    %724 = vmatprep.subr.bf16.mxu0 0
    %725 = vmatpush1.bf16.msra.mxu0 %v702
    %726 = vmatprep.subr.bf16.mxu0 0
    %727 = vmatpush1.bf16.msra.mxu0 %v703
    %728 = vmatprep.subr.bf16.mxu0 0
    %729 = vmatpush1.bf16.msra.mxu0 0
    %730 = vmatprep.subr.bf16.mxu0 0
    %731 = vmatpush1.bf16.msra.mxu0 0
    %732 = vmatprep.subr.bf16.mxu0 0
    %733 = vmatpush1.bf16.msra.mxu0 0
    %734 = vmatprep.subr.bf16.mxu0 0
    %735 = vmatpush1.bf16.msra.mxu0 0
    %736 = vmatprep.subr.bf16.mxu0 0
    %737 = vmatpush1.bf16.msra.mxu0 0
    %738 = vmatprep.subr.bf16.mxu0 0
    %739 = vmatpush1.bf16.msra.mxu0 0
    %740 = vmatprep.subr.bf16.mxu0 0
    %741 = vmatpush1.bf16.msra.mxu0 0
    %742 = vmatprep.subr.bf16.mxu0 0
    %743 = vmatpush1.bf16.msra.mxu0 0
    %744 = vmatprep.mubr.bf16.mxu0 0
    %745 = vmatmul.mubr.bf16.gmra.mrb[0].mxu0 %v640
    %v746 = vpop.f32.mrb[0].mxu0
    %v747 = vadd.f32 %v662, %v746
    %v748 = vpop.f32.mrb[0].mxu0
    %v749 = vpop.f32.mrb[0].mxu0
    %v750 = vadd.f32 %v662, %v749
    %v751 = vpop.f32.mrb[0].mxu0
    %752 = vdwg.mxu0
    %v753 = vtanh.pop %v747
    %v754 = vtanh.pop %v750
    %vm755 = vcmask 80896
    %v756 = vsel %vm755, %v753, -inf
    %757 = vmax.xlane.f32.xlu0 %v756
    %v758 = vpop.xlane.xlu0 %757
    %v759 = vsel %vm755, %v754, -inf
    %760 = vmax.xlane.f32.xlu0 %v759
    %v761 = vpop.xlane.xlu0 %760
    %v762 = vsub.f32 %v753, %v758
    %v763 = vsub.f32 %v754, %v761
    %v764 = vmul.f32 %v762, 1.442695
    %v765 = vpow.pop %v764
    %v766 = vmul.f32 %v763, 1.442695
    %v767 = vpow.pop %v766
    %v768 = vsel %vm755, %v765, 0.0
    %769 = vadd.xlane.f32.xlu0 %v768
    %v770 = vpop.xlane.xlu0 %769
    %v771 = vsel %vm755, %v767, 0.0
    %772 = vadd.xlane.f32.xlu0 %v771
    %v773 = vpop.xlane.xlu0 %772
    %v774 = vlog2.pop %v770
    %v775 = vmul.f32 %v774, 0.6931472
    %v776 = vlog2.pop %v773
    %v777 = vmul.f32 %v776, 0.6931472
    %v778 = vsub.f32 %v762, %v775
    %v779 = vsub.f32 %v763, %v777
    %780 = vst.msk [vmem:[#allocation7] sm:$0xff] %vm755, %v778
    %781 = vst.msk [vmem:[#allocation7 + $0x8] sm:$0xff] %vm755, %v779
    // Predicated region
    $region30: #{tpu_custom_call.1} parent=1 // pred_check
      _
    $region31: #{tpu_custom_call.1} parent=1 // pred_check_branch
      %783 = sbr.rel (0) target = $region33
    $region32: #{tpu_custom_call.1} parent=1 // pred_region
      %s785 = ssub.s32 256, 256
      %786 = vsyncadd [#allocation4], %s785
      %s787 = sshll.u32 [#allocation7], 4
      %s788 = int_to_ptr.vmem [resolvable:$true] %s787
      %793 = dma.vmem_to_hbm [thread:$0]  %s788, 256, %s5, [#allocation4], 128, 128, 8
    $region33: #{tpu_custom_call.1} parent=1 // pred_fallthru
      _
    // Predicated region
    $region34: #{tpu_custom_call.1} parent=1 // pred_check
      _
    $region35: #{tpu_custom_call.1} parent=1 // pred_check_branch
      %795 = sbr.rel (0) target = $region37
    $region36: #{tpu_custom_call.1} parent=1 // pred_region
      %796 = dma.done [#allocation4], 256
    $region37: #{tpu_custom_call.1} parent=1 // pred_fallthru
      _
    %797 = vsyncpa [#allocation3], 1
    %798 = vsyncpa [#allocation6], 1
    %799 = vsyncpa [#allocation4], 1

</llo_original>
